<compile_context>
chip_gen: v5e
topology: v5e:2x2
jax: 0.10.0
libtpu: 0.0.40
codegen_flags: <defaults>
</compile_context>

<pallas_src>
import math
import jax
import jax.numpy as jnp
from jax.experimental import pallas as pl
from jax.experimental.pallas import tpu as pltpu


def residual_block_kernel(x_ref, w1_ref, b1_ref, w2_ref, b2_ref, o_ref):
    x = x_ref[...]                                       # (TB, D) activation dtype
    w1 = w1_ref[...]                                     # (D, H)  compute dtype, BN folded
    w2 = w2_ref[...]                                     # (H, D)  compute dtype
    # fc1 (+ folded BN, eval) -> relu ; f32 accumulation on the MXU
    h = jnp.dot(x.astype(w1.dtype), w1, preferred_element_type=jnp.float32)
    h = jnp.maximum(h + b1_ref[...], 0.0)                # (TB, H) f32
    # dropout: identity (eval mode)
    # fc2 -> bias -> + residual (in f32) -> relu -> cast to output dtype
    y = jnp.dot(h.astype(w2.dtype), w2, preferred_element_type=jnp.float32)
    y = y + b2_ref[...] + x.astype(jnp.float32)
    o_ref[...] = jnp.maximum(y, 0.0).astype(o_ref.dtype)


def _round_up(n, m):
    return ((n + m - 1) // m) * m


def _choose_tile_b(B, tile_b):
    """Big tiles amortize the ~0.35us/step pipeline overhead, but keep at least
    two grid steps when the batch allows it: on v7x the 'parallel' batch axis
    shards across both TensorCores; on v5e/v6e it preserves DMA/compute overlap."""
    tile_b = _round_up(max(tile_b, 8), 8)
    if B > 8:
        tile_b = min(tile_b, _round_up(pl.cdiv(B, 2), 8))
    tile_b = min(tile_b, _round_up(B, 8))
    return tile_b


def residual_block(x, params, *, tile_b=512, compute_dtype=jnp.bfloat16,
                   out_dtype=None):
    """x: (B, D) in the caller's activation dtype (f32 or bf16 — no wrapper cast).
    params: PyTorch-layout fc1/bn1/fc2 parameters (f32)."""
    B, D = x.shape
    H = params["w1"].shape[0]
    eps = 1e-5
    out_dtype = x.dtype if out_dtype is None else out_dtype

    # Fold BatchNorm1d (eval) into fc1 *in f32*, cast to compute dtype last:
    #   (x@W1^T + b1 - mean)*scale + beta == x @ (W1^T*scale) + (b1*scale + beta - mean*scale)
    scale = params["bn_gamma"] / jnp.sqrt(params["bn_var"] + eps)            # (H,)
    w1_f = (params["w1"].T * scale[None, :]).astype(compute_dtype)           # (D, H)
    b1_f = (params["b1"] * scale + params["bn_beta"]
            - params["bn_mean"] * scale).reshape(1, H).astype(jnp.float32)
    w2_t = params["w2"].T.astype(compute_dtype)                              # (H, D)
    b2 = params["b2"].reshape(1, D).astype(jnp.float32)

    tile_b = _choose_tile_b(B, tile_b)
    num_tiles = pl.cdiv(B, tile_b)
    # Ragged last block (B % tile_b != 0) is handled by Pallas boundary masking:
    # rows past B are never written back to HBM, and rows are independent, so no
    # host-side pad/slice (which would add full extra HBM passes over x and y).

    w_itemsize = jnp.dtype(compute_dtype).itemsize
    cost = pl.CostEstimate(
        flops=4 * B * D * H,                               # two (B,D)x(D,H)-sized matmuls
        transcendentals=0,
        bytes_accessed=(B * D * (jnp.dtype(x.dtype).itemsize
                                 + jnp.dtype(out_dtype).itemsize)  # x in + y out
                        + 2 * D * H * w_itemsize                   # W1, W2
                        + (H + D) * 4),                            # biases (f32)
    )

    return pl.pallas_call(
        residual_block_kernel,
        out_shape=jax.ShapeDtypeStruct((B, D), out_dtype),
        grid_spec=pltpu.PrefetchScalarGridSpec(
            num_scalar_prefetch=0,
            grid=(num_tiles,),
            in_specs=[
                pl.BlockSpec((tile_b, D), lambda i: (i, 0)),   # x tile (streamed)
                # Weights/biases have constant index_maps: DMA'd once, VMEM-resident.
                # TODO(synk): for production D/H on v7x (64 MiB VMEM): add a K
                #   "arbitrary" grid axis + f32 accumulator, pipeline_mode=
                #   pl.Buffered(1) on these constant specs, and/or fp8 weights.
                pl.BlockSpec((D, H), lambda i: (0, 0)),        # W1^T * bn_scale
                pl.BlockSpec((1, H), lambda i: (0, 0)),        # folded bias1 (f32)
                pl.BlockSpec((H, D), lambda i: (0, 0)),        # W2^T
                pl.BlockSpec((1, D), lambda i: (0, 0)),        # b2 (f32)
            ],
            out_specs=pl.BlockSpec((tile_b, D), lambda i: (i, 0)),
        ),
        compiler_params=pltpu.CompilerParams(
            dimension_semantics=("parallel",)),   # batch axis shards across TCs on v7x
        cost_estimate=cost,
    )(x, w1_f, b1_f, w2_t, b2)


def init_params(key, input_size, hidden_size):
    """Deterministic init (xavier_uniform for weights, like the module)."""
    k1, k2, k3, k4, kg, kb, km, kv = jax.random.split(key, 8)

    def xavier_uniform(k, shape):  # shape = (fan_out, fan_in), PyTorch convention
        fan_out, fan_in = shape
        a = math.sqrt(6.0 / (fan_in + fan_out))
        return jax.random.uniform(k, shape, jnp.float32, -a, a)

    return {
        "w1": xavier_uniform(k1, (hidden_size, input_size)),
        "b1": jax.random.uniform(k2, (hidden_size,), jnp.float32, -0.1, 0.1),
        "w2": xavier_uniform(k3, (input_size, hidden_size)),
        "b2": jax.random.uniform(k4, (input_size,), jnp.float32, -0.1, 0.1),
        "bn_gamma": 1.0 + 0.1 * jax.random.normal(kg, (hidden_size,), jnp.float32),
        "bn_beta": 0.1 * jax.random.normal(kb, (hidden_size,), jnp.float32),
        "bn_mean": 0.05 * jax.random.normal(km, (hidden_size,), jnp.float32),
        "bn_var": jnp.abs(1.0 + 0.1 * jax.random.normal(kv, (hidden_size,), jnp.float32)),
    }


def residual_block_ref(x, params):
    """Plain-JAX reference (eval semantics)."""
    eps = 1e-5
    h = x @ params["w1"].T + params["b1"]
    h = (h - params["bn_mean"]) / jnp.sqrt(params["bn_var"] + eps)
    h = h * params["bn_gamma"] + params["bn_beta"]
    h = jnp.maximum(h, 0.0)
    y = h @ params["w2"].T + params["b2"]
    y = y + x
    return jnp.maximum(y, 0.0)


if __name__ == "__main__":
    batch = 200          # not a multiple of the tile -> exercises the ragged last block
    input_size = 128
    hidden_size = 256

    key = jax.random.PRNGKey(0)
    kx, kp = jax.random.split(key)
    x = jax.random.normal(kx, (batch, input_size), jnp.float32)
    params = init_params(kp, input_size, hidden_size)

    ref = residual_block_ref(x, params)

    # f32 path (tight comparison; ragged tail handled in-kernel, no pad/slice)
    out = jax.block_until_ready(residual_block(x, params, compute_dtype=jnp.float32))
    assert out.shape == (batch, input_size)
    assert out.dtype == jnp.float32
    assert jnp.allclose(out, ref, atol=1e-4, rtol=1e-4)

    # bf16 activations in/out + bf16 weights (defaults): caller supplies bf16 x,
    # kernel streams bf16 and writes bf16; residual add / ReLU stay in f32.
    x_bf16 = x.astype(jnp.bfloat16)
    out_bf16 = jax.block_until_ready(residual_block(x_bf16, params))
    assert out_bf16.shape == (batch, input_size)
    assert out_bf16.dtype == jnp.bfloat16
    assert jnp.allclose(out_bf16.astype(jnp.float32), ref, atol=1e-1, rtol=1e-1)

    print("KERNEL_OK")
</pallas_src>

<mosaic_0001>
module attributes {stable_mosaic.version = 11 : i64} {
  func.func @residual_block_kernel(%arg0: i32, %arg1: memref<104x128xf32, #tpu.memory_space<vmem>>, %arg2: memref<128x256xf32, #tpu.memory_space<vmem>>, %arg3: memref<1x256xf32, #tpu.memory_space<vmem>>, %arg4: memref<256x128xf32, #tpu.memory_space<vmem>>, %arg5: memref<1x128xf32, #tpu.memory_space<vmem>>, %arg6: memref<104x128xf32, #tpu.memory_space<vmem>>) attributes {dimension_semantics = [#tpu.dimension_semantics<parallel>], iteration_bounds = array<i64: 2>, scalar_prefetch = 0 : i64, scratch_operands = 0 : i64, tpu.core_type = #tpu.core_type<tc>, window_params = [{transform_indices = @transform_0, window_bounds = array<i64: 104, 128>}, {pipeline_mode = #tpu.pipeline_mode<synchronous>, transform_indices = @transform_1, window_bounds = array<i64: 128, 256>}, {pipeline_mode = #tpu.pipeline_mode<synchronous>, transform_indices = @transform_2, window_bounds = array<i64: 1, 256>}, {pipeline_mode = #tpu.pipeline_mode<synchronous>, transform_indices = @transform_3, window_bounds = array<i64: 256, 128>}, {pipeline_mode = #tpu.pipeline_mode<synchronous>, transform_indices = @transform_4, window_bounds = array<i64: 1, 128>}, {transform_indices = @transform_5, window_bounds = array<i64: 104, 128>}]} {
    %c0 = arith.constant 0 : index
    %c0_0 = arith.constant 0 : index
    %0 = vector.load %arg1[%c0, %c0_0] : memref<104x128xf32, #tpu.memory_space<vmem>>, vector<104x128xf32>
    %c0_1 = arith.constant 0 : index
    %c0_2 = arith.constant 0 : index
    %1 = vector.load %arg2[%c0_1, %c0_2] : memref<128x256xf32, #tpu.memory_space<vmem>>, vector<128x256xf32>
    %c0_3 = arith.constant 0 : index
    %c0_4 = arith.constant 0 : index
    %2 = vector.load %arg4[%c0_3, %c0_4] : memref<256x128xf32, #tpu.memory_space<vmem>>, vector<256x128xf32>
    %cst = arith.constant dense<0.000000e+00> : vector<104x256xf32>
    %3 = tpu.matmul %0, %1, %cst {dimension_numbers = #tpu.dot_dimension_numbers<[1], [0], [0], [1], [0, 0, 1, 1], [], []>} : vector<104x128xf32>, vector<128x256xf32>, vector<104x256xf32> -> vector<104x256xf32>
    %c0_5 = arith.constant 0 : index
    %c0_6 = arith.constant 0 : index
    %4 = vector.load %arg3[%c0_5, %c0_6] : memref<1x256xf32, #tpu.memory_space<vmem>>, vector<1x256xf32>
    %5 = vector.broadcast %4 : vector<1x256xf32> to vector<104x256xf32>
    %6 = arith.addf %3, %5 : vector<104x256xf32>
    %cst_7 = arith.constant 0.000000e+00 : f32
    %7 = vector.broadcast %cst_7 : f32 to vector<104x256xf32>
    %8 = arith.maximumf %6, %7 : vector<104x256xf32>
    %cst_8 = arith.constant dense<0.000000e+00> : vector<104x128xf32>
    %9 = tpu.matmul %8, %2, %cst_8 {dimension_numbers = #tpu.dot_dimension_numbers<[1], [0], [0], [1], [0, 0, 1, 1], [], []>} : vector<104x256xf32>, vector<256x128xf32>, vector<104x128xf32> -> vector<104x128xf32>
    %c0_9 = arith.constant 0 : index
    %c0_10 = arith.constant 0 : index
    %10 = vector.load %arg5[%c0_9, %c0_10] : memref<1x128xf32, #tpu.memory_space<vmem>>, vector<1x128xf32>
    %11 = vector.broadcast %10 : vector<1x128xf32> to vector<104x128xf32>
    %12 = arith.addf %9, %11 : vector<104x128xf32>
    %13 = arith.addf %12, %0 : vector<104x128xf32>
    %cst_11 = arith.constant 0.000000e+00 : f32
    %14 = vector.broadcast %cst_11 : f32 to vector<104x128xf32>
    %15 = arith.maximumf %13, %14 : vector<104x128xf32>
    %c0_12 = arith.constant 0 : index
    %c0_13 = arith.constant 0 : index
    %16 = vector.load %arg6[%c0_12, %c0_13] : memref<104x128xf32, #tpu.memory_space<vmem>>, vector<104x128xf32>
    tpu.vector_store %arg6[%c0_12, %c0_13], %15 {strides = array<i32>} : memref<104x128xf32, #tpu.memory_space<vmem>>, vector<104x128xf32>,
    return
  }
  func.func @transform_0(%arg0: i32) -> (i32, i32) {
    %c0_i32 = arith.constant 0 : i32
    %c0_i32_0 = arith.constant 0 : i32
    return %arg0, %c0_i32 : i32, i32
  }
  func.func @transform_1(%arg0: i32) -> (i32, i32) {
    %c0_i32 = arith.constant 0 : i32
    %c0_i32_0 = arith.constant 0 : i32
    %c0_i32_1 = arith.constant 0 : i32
    return %c0_i32, %c0_i32_0 : i32, i32
  }
  func.func @transform_2(%arg0: i32) -> (i32, i32) {
    %c0_i32 = arith.constant 0 : i32
    %c0_i32_0 = arith.constant 0 : i32
    %c0_i32_1 = arith.constant 0 : i32
    return %c0_i32, %c0_i32_0 : i32, i32
  }
  func.func @transform_3(%arg0: i32) -> (i32, i32) {
    %c0_i32 = arith.constant 0 : i32
    %c0_i32_0 = arith.constant 0 : i32
    %c0_i32_1 = arith.constant 0 : i32
    return %c0_i32, %c0_i32_0 : i32, i32
  }
  func.func @transform_4(%arg0: i32) -> (i32, i32) {
    %c0_i32 = arith.constant 0 : i32
    %c0_i32_0 = arith.constant 0 : i32
    %c0_i32_1 = arith.constant 0 : i32
    return %c0_i32, %c0_i32_0 : i32, i32
  }
  func.func @transform_5(%arg0: i32) -> (i32, i32) {
    %c0_i32 = arith.constant 0 : i32
    %c0_i32_0 = arith.constant 0 : i32
    return %arg0, %c0_i32 : i32, i32
  }
}

</mosaic_0001>

<llo_original>
// kernel: tpu_custom_call.1
$region0: #{tpu_custom_call.1}
  #allocation0 [shape = 'u32[]', space=smem, size = 0x4, offset = 0x4, fixed_abs, tag = 'smem constant byte address 0x4 - core index']
  #allocation1 [shape = 'u32[72,128]{1,0:T(1,128)}', space=vmem, size = 0x9000, scoped, tag = 'internal scratch']
  %s0 = inlined_call_operand.hbm [shape: f32[200,128], index: 0, kind: input, shape index: {}]
  %s1 = inlined_call_operand.hbm [shape: f32[128,256], index: 1, kind: input, shape index: {}]
  %s2 = inlined_call_operand.hbm [shape: f32[1,256], index: 2, kind: input, shape index: {}]
  %s3 = inlined_call_operand.hbm [shape: f32[256,128], index: 3, kind: input, shape index: {}]
  %s4 = inlined_call_operand.vmem [shape: f32[1,128], index: 4, kind: input, shape index: {}]
  %s5 = inlined_call_operand.hbm [shape: f32[200,128], index: 5, kind: output, shape index: {}]
  %s6 = sld [smem:[#allocation0]]
  $region69: #{tpu_custom_call.1} parent=0
    _
  %s8 = ssub.s32 1, %s6
  %s9 = scalar_select 0, %s8, %s6
  $region1: #{tpu_custom_call.1} parent=0
    #allocation2 [shape = 'u8[106496]{0}', space=vmem, size = 0x1a000, scoped, tag = 'input window, operand 0']
    #allocation3 [shape = 's32[2]{0}', space=sflag, size = 0x8, scoped, tag = 'scoped memory for tpu_custom_call.1']
    #allocation4 [shape = 's32[2]{0}', space=sflag, size = 0x8, scoped, tag = 'scoped memory for tpu_custom_call.1']
    #allocation5 [shape = 'u8[131072]{0}', space=vmem, size = 0x20000, scoped, tag = 'input window, operand 1, single buffered']
    #allocation6 [shape = 's32[1]{0}', space=sflag, size = 0x4, scoped, tag = 'scoped memory for tpu_custom_call.1']
    #allocation7 [shape = 'u8[1024]{0}', space=vmem, size = 0x400, scoped, tag = 'input window, operand 2, single buffered']
    #allocation8 [shape = 'u8[131072]{0}', space=vmem, size = 0x20000, scoped, tag = 'input window, operand 3, single buffered']
    #allocation9 [shape = 's32[1]{0}', space=sflag, size = 0x4, scoped, tag = 'scoped memory for tpu_custom_call.1']
    #allocation10 [shape = 'u8[106496]{0}', space=vmem, size = 0x1a000, scoped, tag = 'output window, operand 0']
    %10 = vsyncpa [#allocation3], 0
    %s11 = scalar_lea.sflag [#allocation3], 1
    %12 = vsyncpa %s11, 0
    %13 = vsyncpa [#allocation6], 0
    %14 = vsyncpa [#allocation9], 0
    %15 = vsyncpa [#allocation4], 0
    %s16 = scalar_lea.sflag [#allocation4], 1
    %17 = vsyncpa %s16, 0
    loop: start=0, step=1, limit=4
    $region2: #{tpu_custom_call.1} parent=1 // loop_pre_header
      _
    $region3: #{tpu_custom_call.1} parent=1 // loop_header
      %s19 = sphi 0, %s23
      %p20 = scmp.ge.s32.totalorder %s19, 4
      %s29 = sphi 0, %s31
      %s32 = sphi 0, %s29
      %s33 = sphi 0, %s32
      %s49 = sphi 0, %s33
      %s53 = sphi 0, %s53
      %s55 = sphi 0, %s53
      %s56 = sphi 0, %s55
      %s70 = sphi 0, %s56
      %s74 = sphi 0, %s74
      %s76 = sphi 0, %s74
      %s77 = sphi 0, %s76
      %s91 = sphi 0, %s77
      %s95 = sphi 0, %s95
      %s97 = sphi 0, %s95
      %s98 = sphi 0, %s97
      %s112 = sphi 0, %s98
      %s116 = sphi 0, %s116
      %s118 = sphi 0, %s116
      %s119 = sphi 0, %s118
      %s133 = sphi 0, %s119
      %s139 = sphi 0, %s141
      %s142 = sphi 0, %s139
      %s143 = sphi 0, %s142
      %s159 = sphi 0, %s143
    $region4: #{tpu_custom_call.1} parent=1 // loop_header_branch
      %22 = sbr.rel (%p20) target = $region8
    $region5: #{tpu_custom_call.1} parent=1 // loop_body
      %s24 = ssub.s32 %s19, 1
      %s25 = ssub.s32 %s19, 2
      %s26 = sadd.s32 %s19, 1
      %s27 = ssub.s32 %s19, %s26
      %p28 = scmp.eq.s32.totalorder %s27, 0
      %s30 = sadd.s32 %s29, 1
      %s31 = scalar_select %p28, %s29, %s30
      %p34 = pneg %p28
      %p35 = scmp.eq.s32.totalorder %s19, 1
      %p36 = por %p34, %p35
      %p37 = scmp.ne.s32.totalorder %s29, %s32
      %p38 = scmp.eq.s32.totalorder %s19, 0
      %p39 = por %p37, %p38
      %p40 = scmp.ne.s32.totalorder %s29, %s32
      %p41 = scmp.eq.s32.totalorder %s24, 1
      %p42 = por %p40, %p41
      %p43 = scmp.ne.s32.totalorder %s32, %s33
      %p44 = scmp.eq.s32.totalorder %s24, 0
      %p45 = por %p43, %p44
      %p46 = scmp.ne.s32.totalorder %s32, %s33
      %p47 = scmp.eq.s32.totalorder %s25, 1
      %p48 = por %p46, %p47
      %p50 = scmp.ne.s32.totalorder %s33, %s49
      %p51 = scmp.eq.s32.totalorder %s25, 0
      %p52 = por %p50, %p51
      %s54 = sadd.s32 %s53, 1
      %p57 = scmp.eq.s32.totalorder %s19, 1
      %p58 = scmp.ne.s32.totalorder %s53, %s55
      %p59 = scmp.eq.s32.totalorder %s19, 0
      %p60 = por %p58, %p59
      %p61 = scmp.ne.s32.totalorder %s53, %s55
      %p62 = scmp.eq.s32.totalorder %s24, 1
      %p63 = por %p61, %p62
      %p64 = scmp.ne.s32.totalorder %s55, %s56
      %p65 = scmp.eq.s32.totalorder %s24, 0
      %p66 = por %p64, %p65
      %p67 = scmp.ne.s32.totalorder %s55, %s56
      %p68 = scmp.eq.s32.totalorder %s25, 1
      %p69 = por %p67, %p68
      %p71 = scmp.ne.s32.totalorder %s56, %s70
      %p72 = scmp.eq.s32.totalorder %s25, 0
      %p73 = por %p71, %p72
      %s75 = sadd.s32 %s74, 1
      %p78 = scmp.eq.s32.totalorder %s19, 1
      %p79 = scmp.ne.s32.totalorder %s74, %s76
      %p80 = scmp.eq.s32.totalorder %s19, 0
      %p81 = por %p79, %p80
      %p82 = scmp.ne.s32.totalorder %s74, %s76
      %p83 = scmp.eq.s32.totalorder %s24, 1
      %p84 = por %p82, %p83
      %p85 = scmp.ne.s32.totalorder %s76, %s77
      %p86 = scmp.eq.s32.totalorder %s24, 0
      %p87 = por %p85, %p86
      %p88 = scmp.ne.s32.totalorder %s76, %s77
      %p89 = scmp.eq.s32.totalorder %s25, 1
      %p90 = por %p88, %p89
      %p92 = scmp.ne.s32.totalorder %s77, %s91
      %p93 = scmp.eq.s32.totalorder %s25, 0
      %p94 = por %p92, %p93
      %s96 = sadd.s32 %s95, 1
      %p99 = scmp.eq.s32.totalorder %s19, 1
      %p100 = scmp.ne.s32.totalorder %s95, %s97
      %p101 = scmp.eq.s32.totalorder %s19, 0
      %p102 = por %p100, %p101
      %p103 = scmp.ne.s32.totalorder %s95, %s97
      %p104 = scmp.eq.s32.totalorder %s24, 1
      %p105 = por %p103, %p104
      %p106 = scmp.ne.s32.totalorder %s97, %s98
      %p107 = scmp.eq.s32.totalorder %s24, 0
      %p108 = por %p106, %p107
      %p109 = scmp.ne.s32.totalorder %s97, %s98
      %p110 = scmp.eq.s32.totalorder %s25, 1
      %p111 = por %p109, %p110
      %p113 = scmp.ne.s32.totalorder %s98, %s112
      %p114 = scmp.eq.s32.totalorder %s25, 0
      %p115 = por %p113, %p114
      %s117 = sadd.s32 %s116, 1
      %p120 = scmp.eq.s32.totalorder %s19, 1
      %p121 = scmp.ne.s32.totalorder %s116, %s118
      %p122 = scmp.eq.s32.totalorder %s19, 0
      %p123 = por %p121, %p122
      %p124 = scmp.ne.s32.totalorder %s116, %s118
      %p125 = scmp.eq.s32.totalorder %s24, 1
      %p126 = por %p124, %p125
      %p127 = scmp.ne.s32.totalorder %s118, %s119
      %p128 = scmp.eq.s32.totalorder %s24, 0
      %p129 = por %p127, %p128
      %p130 = scmp.ne.s32.totalorder %s118, %s119
      %p131 = scmp.eq.s32.totalorder %s25, 1
      %p132 = por %p130, %p131
      %p134 = scmp.ne.s32.totalorder %s119, %s133
      %p135 = scmp.eq.s32.totalorder %s25, 0
      %p136 = por %p134, %p135
      %s137 = ssub.s32 %s19, %s26
      %p138 = scmp.eq.s32.totalorder %s137, 0
      %s140 = sadd.s32 %s139, 1
      %s141 = scalar_select %p138, %s139, %s140
      %p144 = pneg %p138
      %p145 = scmp.eq.s32.totalorder %s19, 1
      %p146 = por %p144, %p145
      %p147 = scmp.ne.s32.totalorder %s139, %s142
      %p148 = scmp.eq.s32.totalorder %s19, 0
      %p149 = por %p147, %p148
      %p150 = scmp.ne.s32.totalorder %s139, %s142
      %p151 = scmp.eq.s32.totalorder %s24, 1
      %p152 = por %p150, %p151
      %p153 = scmp.ne.s32.totalorder %s142, %s143
      %p154 = scmp.eq.s32.totalorder %s24, 0
      %p155 = por %p153, %p154
      %p156 = scmp.ne.s32.totalorder %s142, %s143
      %p157 = scmp.eq.s32.totalorder %s25, 1
      %p158 = por %p156, %p157
      %p160 = scmp.ne.s32.totalorder %s143, %s159
      %p161 = scmp.eq.s32.totalorder %s25, 0
      %p162 = por %p160, %p161
      %p163 = scmp.le.s32.totalorder 1, %s19
      %p164 = scmp.lt.s32.totalorder %s19, 3
      %p165 = pnand %p163, %p164
      %p166 = pneg %p165
      // Predicated region
      $region9: #{tpu_custom_call.1} parent=5 // pred_check
        _
      $region10: #{tpu_custom_call.1} parent=5 // pred_check_branch
        %168 = sbr.rel (%p165) target = $region12
      $region11: #{tpu_custom_call.1} parent=5 // pred_region
        %s169 = ssub.s32 %s19, 1
        // Predicated region
        $region13: #{tpu_custom_call.1} parent=11 // pred_check
          %p170 = pneg %p66
        $region14: #{tpu_custom_call.1} parent=11 // pred_check_branch
          %172 = sbr.rel (%p170) target = $region16
        $region15: #{tpu_custom_call.1} parent=11 // pred_region
          %174 = vsyncadd [#allocation6], 0
          %s175 = sshll.u32 %s1, 4
          %s176 = int_to_ptr.hbm [resolvable:$true] %s175
          %s177 = sshll.u32 [#allocation5], 4
          %s178 = int_to_ptr.vmem [resolvable:$true] %s177
          %183 = dma.hbm_to_vmem [thread:$0]  %s176, 4096, %s178, [#allocation6], 256, 256, 16
        $region16: #{tpu_custom_call.1} parent=11 // pred_fallthru
          _
        // Predicated region
        $region17: #{tpu_custom_call.1} parent=11 // pred_check
          %p184 = pneg %p87
        $region18: #{tpu_custom_call.1} parent=11 // pred_check_branch
          %186 = sbr.rel (%p184) target = $region20
        $region19: #{tpu_custom_call.1} parent=11 // pred_region
          %188 = vsyncadd [#allocation6], 0
          %s190 = sshll.u32 %s2, 4
          %s191 = int_to_ptr.hbm [resolvable:$true] %s190
          %s192 = sshll.u32 [#allocation7], 4
          %s193 = int_to_ptr.vmem [resolvable:$true] %s192
          %195 = dma.hbm_to_vmem [thread:$0]  %s191, 32, %s193, [#allocation6]
        $region20: #{tpu_custom_call.1} parent=11 // pred_fallthru
          _
        // Predicated region
        $region21: #{tpu_custom_call.1} parent=11 // pred_check
          %p196 = pneg %p108
        $region22: #{tpu_custom_call.1} parent=11 // pred_check_branch
          %198 = sbr.rel (%p196) target = $region24
        $region23: #{tpu_custom_call.1} parent=11 // pred_region
          %200 = vsyncadd [#allocation9], 0
          %s201 = sshll.u32 %s3, 4
          %s202 = int_to_ptr.hbm [resolvable:$true] %s201
          %s203 = sshll.u32 [#allocation8], 4
          %s204 = int_to_ptr.vmem [resolvable:$true] %s203
          %209 = dma.hbm_to_vmem [thread:$0]  %s202, 4096, %s204, [#allocation9], 128, 128, 8
        $region24: #{tpu_custom_call.1} parent=11 // pred_fallthru
          _
        // Predicated region
        $region25: #{tpu_custom_call.1} parent=11 // pred_check
          %p210 = pneg %p129
        $region26: #{tpu_custom_call.1} parent=11 // pred_check_branch
          %212 = sbr.rel (%p210) target = $region28
        $region27: #{tpu_custom_call.1} parent=11 // pred_region
          _
        $region28: #{tpu_custom_call.1} parent=11 // pred_fallthru
          _
      $region12: #{tpu_custom_call.1} parent=5 // pred_fallthru
        _
      %p213 = scmp.lt.s32.totalorder %s19, 2
      // Predicated region
      $region29: #{tpu_custom_call.1} parent=5 // pred_check
        %p214 = pneg %p213
      $region30: #{tpu_custom_call.1} parent=5 // pred_check_branch
        %216 = sbr.rel (%p214) target = $region32
      $region31: #{tpu_custom_call.1} parent=5 // pred_region
        // Predicated region
        $region33: #{tpu_custom_call.1} parent=31 // pred_check
          %p217 = pneg %p39
        $region34: #{tpu_custom_call.1} parent=31 // pred_check_branch
          %219 = sbr.rel (%p217) target = $region36
        $region35: #{tpu_custom_call.1} parent=31 // pred_region
          %s220 = sand.u32 %s29, 1
          %s221 = scalar_lea.sflag [#allocation3], %s220
          %s222 = sand.u32 %s29, 1
          %s223 = smul.addr %s222, 104
          %s224 = scalar_lea.vmem [#allocation2], %s223
          %s225 = smul.u32 13, %s19
          %s226 = ssub.s32 25, %s225
          %p227 = scmp.lt.s32.totalorder %s226, 13
          %s228 = scalar_select %p227, %s226, 13
          %s229 = smul.u32 8, %s228
          %s230 = ssub.s32 104, %s229
          %s231 = sshll.u32 %s230, 4
          %232 = vsyncadd %s221, %s231
          %p233 = scmp.ne.s32.totalorder 0, %s229
          %s234 = smul.addr %s225, 8
          %s235 = scalar_lea.hbm %s0, %s234
          %s236 = smul.u32 8, %s228
          %s237 = sshll.u32 %s235, 4
          %s238 = int_to_ptr.hbm [resolvable:$true] %s237
          %s239 = sshll.u32 %s224, 4
          %s240 = int_to_ptr.vmem [resolvable:$true] %s239
          %s241 = sshll.u32 %s236, 4
          %245 = dma.hbm_to_vmem [thread:$0]  (%p233), %s238, %s241, %s240, %s221, 128, 128, 8
        $region36: #{tpu_custom_call.1} parent=31 // pred_fallthru
          _
      $region32: #{tpu_custom_call.1} parent=5 // pred_fallthru
        _
      %p246 = scmp.le.s32.totalorder 1, %s19
      %p247 = scmp.lt.s32.totalorder %s19, 3
      %p248 = pnand %p246, %p247
      %p249 = pneg %p248
      // Predicated region
      $region37: #{tpu_custom_call.1} parent=5 // pred_check
        _
      $region38: #{tpu_custom_call.1} parent=5 // pred_check_branch
        %251 = sbr.rel (%p248) target = $region40
      $region39: #{tpu_custom_call.1} parent=5 // pred_region
        %s252 = ssub.s32 %s19, 1
        %s253 = sand.u32 %s32, 1
        %s254 = scalar_lea.sflag [#allocation3], %s253
        %s255 = sand.u32 %s32, 1
        %s256 = smul.addr %s255, 104
        %s257 = scalar_lea.vmem [#allocation2], %s256
        // Predicated region
        $region41: #{tpu_custom_call.1} parent=39 // pred_check
          %p258 = pneg %p45
        $region42: #{tpu_custom_call.1} parent=39 // pred_check_branch
          %260 = sbr.rel (%p258) target = $region44
        $region43: #{tpu_custom_call.1} parent=39 // pred_region
          %262 = dma.done %s254, 1664
        $region44: #{tpu_custom_call.1} parent=39 // pred_fallthru
          _
        // Predicated region
        $region45: #{tpu_custom_call.1} parent=39 // pred_check
          %p263 = pneg %p66
        $region46: #{tpu_custom_call.1} parent=39 // pred_check_branch
          %265 = sbr.rel (%p263) target = $region48
        $region47: #{tpu_custom_call.1} parent=39 // pred_region
          %267 = dma.done [#allocation6], 4096
        $region48: #{tpu_custom_call.1} parent=39 // pred_fallthru
          _
        // Predicated region
        $region49: #{tpu_custom_call.1} parent=39 // pred_check
          %p268 = pneg %p87
        $region50: #{tpu_custom_call.1} parent=39 // pred_check_branch
          %270 = sbr.rel (%p268) target = $region52
        $region51: #{tpu_custom_call.1} parent=39 // pred_region
          %272 = dma.done [#allocation6], 32
        $region52: #{tpu_custom_call.1} parent=39 // pred_fallthru
          _
        // Predicated region
        $region53: #{tpu_custom_call.1} parent=39 // pred_check
          %p273 = pneg %p108
        $region54: #{tpu_custom_call.1} parent=39 // pred_check_branch
          %275 = sbr.rel (%p273) target = $region56
        $region55: #{tpu_custom_call.1} parent=39 // pred_region
          %277 = dma.done [#allocation9], 4096
        $region56: #{tpu_custom_call.1} parent=39 // pred_fallthru
          _
        %s278 = sand.u32 %s32, 1
        %s279 = scalar_lea.sflag [#allocation3], %s278
        %s280 = sand.u32 %s32, 1
        %s281 = smul.addr %s280, 104
        %s282 = scalar_lea.vmem [#allocation2], %s281
        %p283 = pneg %p45
        %p284 = pneg %p42
        %p285 = pneg %p66
        %p286 = pneg %p63
        %p287 = pneg %p87
        %p288 = pneg %p84
        %p289 = pneg %p108
        %p290 = pneg %p105
        %p291 = pneg %p129
        %p292 = pneg %p126
        %p293 = pneg %p155
        %p294 = pneg %p152
        %s295 = sand.u32 %s142, 1
        %s296 = scalar_lea.sflag [#allocation4], %s295
        %s297 = sand.u32 %s142, 1
        %s298 = smul.addr %s297, 104
        %s299 = scalar_lea.vmem [#allocation10], %s298
        %s300 = smul.u32 13, %s24
        %s301 = ssub.s32 25, %s300
        %p302 = scmp.lt.s32.totalorder %s301, 13
        %s303 = scalar_select %p302, %s301, 13
        %s304 = smul.u32 8, %s303
        %s305 = smul.u32 13, %s24
        %s306 = ssub.s32 25, %s305
        %p307 = scmp.lt.s32.totalorder %s306, 13
        %s308 = scalar_select %p307, %s306, 13
        %s309 = smul.u32 8, %s308
        %v310 = vld [vmem:[%s257] sm:$0xff]
        %v311 = vld [vmem:[%s257 + $0x8] sm:$0xff]
        %v312 = vld [vmem:[%s257 + $0x10] sm:$0xff]
        %v313 = vld [vmem:[%s257 + $0x18] sm:$0xff]
        %v314 = vld [vmem:[%s257 + $0x20] sm:$0xff]
        %v315 = vld [vmem:[%s257 + $0x28] sm:$0xff]
        %v316 = vld [vmem:[%s257 + $0x30] sm:$0xff]
        %v317 = vld [vmem:[%s257 + $0x38] sm:$0xff]
        %v318 = vld [vmem:[%s257 + $0x40] sm:$0xff]
        %v319 = vld [vmem:[%s257 + $0x48] sm:$0xff]
        %v320 = vld [vmem:[%s257 + $0x50] sm:$0xff]
        %v321 = vld [vmem:[%s257 + $0x58] sm:$0xff]
        %v322 = vld [vmem:[%s257 + $0x60] sm:$0xff]
        %v323 = vld [vmem:[#allocation5] sm:$0xff]
        %v324 = vld [vmem:[#allocation5 + $0x8] sm:$0xff]
        %v325 = vld [vmem:[#allocation5 + $0x10] sm:$0xff]
        %v326 = vld [vmem:[#allocation5 + $0x18] sm:$0xff]
        %v327 = vld [vmem:[#allocation5 + $0x20] sm:$0xff]
        %v328 = vld [vmem:[#allocation5 + $0x28] sm:$0xff]
        %v329 = vld [vmem:[#allocation5 + $0x30] sm:$0xff]
        %v330 = vld [vmem:[#allocation5 + $0x38] sm:$0xff]
        %v331 = vld [vmem:[#allocation5 + $0x40] sm:$0xff]
        %v332 = vld [vmem:[#allocation5 + $0x48] sm:$0xff]
        %v333 = vld [vmem:[#allocation5 + $0x50] sm:$0xff]
        %v334 = vld [vmem:[#allocation5 + $0x58] sm:$0xff]
        %v335 = vld [vmem:[#allocation5 + $0x60] sm:$0xff]
        %v336 = vld [vmem:[#allocation5 + $0x68] sm:$0xff]
        %v337 = vld [vmem:[#allocation5 + $0x70] sm:$0xff]
        %v338 = vld [vmem:[#allocation5 + $0x78] sm:$0xff]
        %v339 = vld [vmem:[#allocation5 + $0x80] sm:$0xff]
        %v340 = vld [vmem:[#allocation5 + $0x88] sm:$0xff]
        %v341 = vld [vmem:[#allocation5 + $0x90] sm:$0xff]
        %v342 = vld [vmem:[#allocation5 + $0x98] sm:$0xff]
        %v343 = vld [vmem:[#allocation5 + $0xa0] sm:$0xff]
        %v344 = vld [vmem:[#allocation5 + $0xa8] sm:$0xff]
        %v345 = vld [vmem:[#allocation5 + $0xb0] sm:$0xff]
        %v346 = vld [vmem:[#allocation5 + $0xb8] sm:$0xff]
        %v347 = vld [vmem:[#allocation5 + $0xc0] sm:$0xff]
        %v348 = vld [vmem:[#allocation5 + $0xc8] sm:$0xff]
        %v349 = vld [vmem:[#allocation5 + $0xd0] sm:$0xff]
        %v350 = vld [vmem:[#allocation5 + $0xd8] sm:$0xff]
        %v351 = vld [vmem:[#allocation5 + $0xe0] sm:$0xff]
        %v352 = vld [vmem:[#allocation5 + $0xe8] sm:$0xff]
        %v353 = vld [vmem:[#allocation5 + $0xf0] sm:$0xff]
        %v354 = vld [vmem:[#allocation5 + $0xf8] sm:$0xff]
        %v355 = vld [vmem:[#allocation8] sm:$0xff]
        %v356 = vld [vmem:[#allocation8 + $0x8] sm:$0xff]
        %v357 = vld [vmem:[#allocation8 + $0x10] sm:$0xff]
        %v358 = vld [vmem:[#allocation8 + $0x18] sm:$0xff]
        %v359 = vld [vmem:[#allocation8 + $0x20] sm:$0xff]
        %v360 = vld [vmem:[#allocation8 + $0x28] sm:$0xff]
        %v361 = vld [vmem:[#allocation8 + $0x30] sm:$0xff]
        %v362 = vld [vmem:[#allocation8 + $0x38] sm:$0xff]
        %v363 = vld [vmem:[#allocation8 + $0x40] sm:$0xff]
        %v364 = vld [vmem:[#allocation8 + $0x48] sm:$0xff]
        %v365 = vld [vmem:[#allocation8 + $0x50] sm:$0xff]
        %v366 = vld [vmem:[#allocation8 + $0x58] sm:$0xff]
        %v367 = vld [vmem:[#allocation8 + $0x60] sm:$0xff]
        %v368 = vld [vmem:[#allocation8 + $0x68] sm:$0xff]
        %v369 = vld [vmem:[#allocation8 + $0x70] sm:$0xff]
        %v370 = vld [vmem:[#allocation8 + $0x78] sm:$0xff]
        %v371 = vld [vmem:[#allocation8 + $0x80] sm:$0xff]
        %v372 = vld [vmem:[#allocation8 + $0x88] sm:$0xff]
        %v373 = vld [vmem:[#allocation8 + $0x90] sm:$0xff]
        %v374 = vld [vmem:[#allocation8 + $0x98] sm:$0xff]
        %v375 = vld [vmem:[#allocation8 + $0xa0] sm:$0xff]
        %v376 = vld [vmem:[#allocation8 + $0xa8] sm:$0xff]
        %v377 = vld [vmem:[#allocation8 + $0xb0] sm:$0xff]
        %v378 = vld [vmem:[#allocation8 + $0xb8] sm:$0xff]
        %v379 = vld [vmem:[#allocation8 + $0xc0] sm:$0xff]
        %v380 = vld [vmem:[#allocation8 + $0xc8] sm:$0xff]
        %v381 = vld [vmem:[#allocation8 + $0xd0] sm:$0xff]
        %v382 = vld [vmem:[#allocation8 + $0xd8] sm:$0xff]
        %v383 = vld [vmem:[#allocation8 + $0xe0] sm:$0xff]
        %v384 = vld [vmem:[#allocation8 + $0xe8] sm:$0xff]
        %v385 = vld [vmem:[#allocation8 + $0xf0] sm:$0xff]
        %v386 = vld [vmem:[#allocation8 + $0xf8] sm:$0xff]
        %v387 = vld [vmem:[#allocation7] sm:$0x3]
        %v389 = vperm.slane %v387, 0
        %v390 = vperm.slane %v387, 1
        %393 = vmatpush.msra.mxu0 %v353
        %394 = vmatpush.msra.mxu0 %v351
        %395 = vmatpush.msra.mxu0 %v349
        %396 = vmatpush.msra.mxu0 %v347
        %397 = vmatpush.msra.mxu0 %v345
        %398 = vmatpush.msra.mxu0 %v343
        %399 = vmatpush.msra.mxu0 %v341
        %400 = vmatpush.msra.mxu0 %v339
        %401 = vmatpush.msra.mxu0 %v337
        %402 = vmatpush.msra.mxu0 %v335
        %403 = vmatpush.msra.mxu0 %v333
        %404 = vmatpush.msra.mxu0 %v331
        %405 = vmatpush.msra.mxu0 %v329
        %406 = vmatpush.msra.mxu0 %v327
        %407 = vmatpush.msra.mxu0 %v325
        %408 = vmatpush.msra.mxu0 %v323
        %409 = vmatmul.f32.gmra.mxu0 %v310
        %v410 = vpop.f32.mrf.mxu0
        %v411 = vadd.f32 %v389, %v410
        %412 = vmatmul.f32.gmra.mxu0 %v311
        %v413 = vpop.f32.mrf.mxu0
        %v414 = vadd.f32 %v389, %v413
        %415 = vmatmul.f32.gmra.mxu0 %v312
        %v416 = vpop.f32.mrf.mxu0
        %v417 = vadd.f32 %v389, %v416
        %418 = vmatmul.f32.gmra.mxu0 %v313
        %v419 = vpop.f32.mrf.mxu0
        %v420 = vadd.f32 %v389, %v419
        %421 = vmatmul.f32.gmra.mxu0 %v314
        %v422 = vpop.f32.mrf.mxu0
        %v423 = vadd.f32 %v389, %v422
        %424 = vmatmul.f32.gmra.mxu0 %v315
        %v425 = vpop.f32.mrf.mxu0
        %v426 = vadd.f32 %v389, %v425
        %427 = vmatmul.f32.gmra.mxu0 %v316
        %v428 = vpop.f32.mrf.mxu0
        %v429 = vadd.f32 %v389, %v428
        %430 = vmatmul.f32.gmra.mxu0 %v317
        %v431 = vpop.f32.mrf.mxu0
        %v432 = vadd.f32 %v389, %v431
        %433 = vmatmul.f32.gmra.mxu0 %v318
        %v434 = vpop.f32.mrf.mxu0
        %v435 = vadd.f32 %v389, %v434
        %436 = vmatmul.f32.gmra.mxu0 %v319
        %v437 = vpop.f32.mrf.mxu0
        %v438 = vadd.f32 %v389, %v437
        %439 = vmatmul.f32.gmra.mxu0 %v320
        %v440 = vpop.f32.mrf.mxu0
        %v441 = vadd.f32 %v389, %v440
        %442 = vmatmul.f32.gmra.mxu0 %v321
        %v443 = vpop.f32.mrf.mxu0
        %v444 = vadd.f32 %v389, %v443
        %445 = vmatmul.f32.gmra.mxu0 %v322
        %v446 = vpop.f32.mrf.mxu0
        %v447 = vadd.f32 %v389, %v446
        %448 = vdwg.mxu0
        %449 = vmatpush.msra.mxu0 %v354
        %450 = vmatpush.msra.mxu0 %v352
        %451 = vmatpush.msra.mxu0 %v350
        %452 = vmatpush.msra.mxu0 %v348
        %453 = vmatpush.msra.mxu0 %v346
        %454 = vmatpush.msra.mxu0 %v344
        %455 = vmatpush.msra.mxu0 %v342
        %456 = vmatpush.msra.mxu0 %v340
        %457 = vmatpush.msra.mxu0 %v338
        %458 = vmatpush.msra.mxu0 %v336
        %459 = vmatpush.msra.mxu0 %v334
        %460 = vmatpush.msra.mxu0 %v332
        %461 = vmatpush.msra.mxu0 %v330
        %462 = vmatpush.msra.mxu0 %v328
        %463 = vmatpush.msra.mxu0 %v326
        %464 = vmatpush.msra.mxu0 %v324
        %465 = vmatmul.f32.gmra.mxu0 %v310
        %v466 = vpop.f32.mrf.mxu0
        %v467 = vadd.f32 %v390, %v466
        %468 = vmatmul.f32.gmra.mxu0 %v311
        %v469 = vpop.f32.mrf.mxu0
        %v470 = vadd.f32 %v390, %v469
        %471 = vmatmul.f32.gmra.mxu0 %v312
        %v472 = vpop.f32.mrf.mxu0
        %v473 = vadd.f32 %v390, %v472
        %474 = vmatmul.f32.gmra.mxu0 %v313
        %v475 = vpop.f32.mrf.mxu0
        %v476 = vadd.f32 %v390, %v475
        %477 = vmatmul.f32.gmra.mxu0 %v314
        %v478 = vpop.f32.mrf.mxu0
        %v479 = vadd.f32 %v390, %v478
        %480 = vmatmul.f32.gmra.mxu0 %v315
        %v481 = vpop.f32.mrf.mxu0
        %v482 = vadd.f32 %v390, %v481
        %483 = vmatmul.f32.gmra.mxu0 %v316
        %v484 = vpop.f32.mrf.mxu0
        %v485 = vadd.f32 %v390, %v484
        %486 = vmatmul.f32.gmra.mxu0 %v317
        %v487 = vpop.f32.mrf.mxu0
        %v488 = vadd.f32 %v390, %v487
        %489 = vmatmul.f32.gmra.mxu0 %v318
        %v490 = vpop.f32.mrf.mxu0
        %v491 = vadd.f32 %v390, %v490
        %492 = vmatmul.f32.gmra.mxu0 %v319
        %v493 = vpop.f32.mrf.mxu0
        %v494 = vadd.f32 %v390, %v493
        %495 = vmatmul.f32.gmra.mxu0 %v320
        %v496 = vpop.f32.mrf.mxu0
        %v497 = vadd.f32 %v390, %v496
        %498 = vmatmul.f32.gmra.mxu0 %v321
        %v499 = vpop.f32.mrf.mxu0
        %v500 = vadd.f32 %v390, %v499
        %501 = vmatmul.f32.gmra.mxu0 %v322
        %v502 = vpop.f32.mrf.mxu0
        %v503 = vadd.f32 %v390, %v502
        %504 = vdwg.mxu0
        %v505 = vmax.f32 %v411, 0.0
        %v506 = vmax.f32 %v467, 0.0
        %v507 = vmax.f32 %v414, 0.0
        %v508 = vmax.f32 %v470, 0.0
        %v509 = vmax.f32 %v417, 0.0
        %v510 = vmax.f32 %v473, 0.0
        %v511 = vmax.f32 %v420, 0.0
        %v512 = vmax.f32 %v476, 0.0
        %v513 = vmax.f32 %v423, 0.0
        %v514 = vmax.f32 %v479, 0.0
        %v515 = vmax.f32 %v426, 0.0
        %v516 = vmax.f32 %v482, 0.0
        %v517 = vmax.f32 %v429, 0.0
        %v518 = vmax.f32 %v485, 0.0
        %v519 = vmax.f32 %v432, 0.0
        %v520 = vmax.f32 %v488, 0.0
        %v521 = vmax.f32 %v435, 0.0
        %v522 = vmax.f32 %v491, 0.0
        %v523 = vmax.f32 %v438, 0.0
        %v524 = vmax.f32 %v494, 0.0
        %v525 = vmax.f32 %v441, 0.0
        %v526 = vmax.f32 %v497, 0.0
        %v527 = vmax.f32 %v444, 0.0
        %v528 = vmax.f32 %v500, 0.0
        %v529 = vmax.f32 %v447, 0.0
        %v530 = vmax.f32 %v503, 0.0
        %v531 = vld [vmem:[%s4] sm:$0x1]
        %v533 = vperm.slane %v531, 0
        %535 = vmatpush.msra.mxu0 %v370
        %536 = vmatpush.msra.mxu0 %v369
        %537 = vmatpush.msra.mxu0 %v368
        %538 = vmatpush.msra.mxu0 %v367
        %539 = vmatpush.msra.mxu0 %v366
        %540 = vmatpush.msra.mxu0 %v365
        %541 = vmatpush.msra.mxu0 %v364
        %542 = vmatpush.msra.mxu0 %v363
        %543 = vmatpush.msra.mxu0 %v362
        %544 = vmatpush.msra.mxu0 %v361
        %545 = vmatpush.msra.mxu0 %v360
        %546 = vmatpush.msra.mxu0 %v359
        %547 = vmatpush.msra.mxu0 %v358
        %548 = vmatpush.msra.mxu0 %v357
        %549 = vmatpush.msra.mxu0 %v356
        %550 = vmatpush.msra.mxu0 %v355
        %551 = vmatmul.f32.gmra.mxu0 %v505
        %v552 = vpop.f32.mrf.mxu0
        %v553 = vadd.f32 %v533, %v552
        %554 = vmatmul.f32.gmra.mxu0 %v507
        %v555 = vpop.f32.mrf.mxu0
        %v556 = vadd.f32 %v533, %v555
        %557 = vmatmul.f32.gmra.mxu0 %v509
        %v558 = vpop.f32.mrf.mxu0
        %v559 = vadd.f32 %v533, %v558
        %560 = vmatmul.f32.gmra.mxu0 %v511
        %v561 = vpop.f32.mrf.mxu0
        %v562 = vadd.f32 %v533, %v561
        %563 = vmatmul.f32.gmra.mxu0 %v513
        %v564 = vpop.f32.mrf.mxu0
        %v565 = vadd.f32 %v533, %v564
        %566 = vmatmul.f32.gmra.mxu0 %v515
        %v567 = vpop.f32.mrf.mxu0
        %v568 = vadd.f32 %v533, %v567
        %569 = vmatmul.f32.gmra.mxu0 %v517
        %v570 = vpop.f32.mrf.mxu0
        %v571 = vadd.f32 %v533, %v570
        %572 = vmatmul.f32.gmra.mxu0 %v519
        %v573 = vpop.f32.mrf.mxu0
        %v574 = vadd.f32 %v533, %v573
        %575 = vmatmul.f32.gmra.mxu0 %v521
        %v576 = vpop.f32.mrf.mxu0
        %v577 = vadd.f32 %v533, %v576
        %578 = vmatmul.f32.gmra.mxu0 %v523
        %v579 = vpop.f32.mrf.mxu0
        %v580 = vadd.f32 %v533, %v579
        %581 = vmatmul.f32.gmra.mxu0 %v525
        %v582 = vpop.f32.mrf.mxu0
        %v583 = vadd.f32 %v533, %v582
        %584 = vmatmul.f32.gmra.mxu0 %v527
        %v585 = vpop.f32.mrf.mxu0
        %v586 = vadd.f32 %v533, %v585
        %587 = vmatmul.f32.gmra.mxu0 %v529
        %v588 = vpop.f32.mrf.mxu0
        %v589 = vadd.f32 %v533, %v588
        %590 = vdwg.mxu0
        %591 = vmatpush.msra.mxu0 %v386
        %592 = vmatpush.msra.mxu0 %v385
        %593 = vmatpush.msra.mxu0 %v384
        %594 = vmatpush.msra.mxu0 %v383
        %595 = vmatpush.msra.mxu0 %v382
        %596 = vmatpush.msra.mxu0 %v381
        %597 = vmatpush.msra.mxu0 %v380
        %598 = vmatpush.msra.mxu0 %v379
        %599 = vmatpush.msra.mxu0 %v378
        %600 = vmatpush.msra.mxu0 %v377
        %601 = vmatpush.msra.mxu0 %v376
        %602 = vmatpush.msra.mxu0 %v375
        %603 = vmatpush.msra.mxu0 %v374
        %604 = vmatpush.msra.mxu0 %v373
        %605 = vmatpush.msra.mxu0 %v372
        %606 = vmatpush.msra.mxu0 %v371
        %607 = vmatmul.f32.gmra.mxu0 %v506
        %v608 = vpop.f32.mrf.mxu0
        %v609 = vadd.f32 %v553, %v608
        %610 = vmatmul.f32.gmra.mxu0 %v508
        %v611 = vpop.f32.mrf.mxu0
        %v612 = vadd.f32 %v556, %v611
        %613 = vmatmul.f32.gmra.mxu0 %v510
        %v614 = vpop.f32.mrf.mxu0
        %v615 = vadd.f32 %v559, %v614
        %616 = vmatmul.f32.gmra.mxu0 %v512
        %v617 = vpop.f32.mrf.mxu0
        %v618 = vadd.f32 %v562, %v617
        %619 = vmatmul.f32.gmra.mxu0 %v514
        %v620 = vpop.f32.mrf.mxu0
        %v621 = vadd.f32 %v565, %v620
        %622 = vmatmul.f32.gmra.mxu0 %v516
        %v623 = vpop.f32.mrf.mxu0
        %v624 = vadd.f32 %v568, %v623
        %625 = vmatmul.f32.gmra.mxu0 %v518
        %v626 = vpop.f32.mrf.mxu0
        %v627 = vadd.f32 %v571, %v626
        %628 = vmatmul.f32.gmra.mxu0 %v520
        %v629 = vpop.f32.mrf.mxu0
        %v630 = vadd.f32 %v574, %v629
        %631 = vmatmul.f32.gmra.mxu0 %v522
        %v632 = vpop.f32.mrf.mxu0
        %v633 = vadd.f32 %v577, %v632
        %634 = vmatmul.f32.gmra.mxu0 %v524
        %v635 = vpop.f32.mrf.mxu0
        %v636 = vadd.f32 %v580, %v635
        %637 = vmatmul.f32.gmra.mxu0 %v526
        %v638 = vpop.f32.mrf.mxu0
        %v639 = vadd.f32 %v583, %v638
        %640 = vmatmul.f32.gmra.mxu0 %v528
        %v641 = vpop.f32.mrf.mxu0
        %v642 = vadd.f32 %v586, %v641
        %643 = vmatmul.f32.gmra.mxu0 %v530
        %v644 = vpop.f32.mrf.mxu0
        %v645 = vadd.f32 %v589, %v644
        %646 = vdwg.mxu0
        %v647 = vadd.f32 %v609, %v310
        %v648 = vadd.f32 %v612, %v311
        %v649 = vadd.f32 %v615, %v312
        %v650 = vadd.f32 %v618, %v313
        %v651 = vadd.f32 %v621, %v314
        %v652 = vadd.f32 %v624, %v315
        %v653 = vadd.f32 %v627, %v316
        %v654 = vadd.f32 %v630, %v317
        %v655 = vadd.f32 %v633, %v318
        %v656 = vadd.f32 %v636, %v319
        %v657 = vadd.f32 %v639, %v320
        %v658 = vadd.f32 %v642, %v321
        %v659 = vadd.f32 %v645, %v322
        %v660 = vmax.f32 %v647, 0.0
        %v661 = vmax.f32 %v648, 0.0
        %v662 = vmax.f32 %v649, 0.0
        %v663 = vmax.f32 %v650, 0.0
        %v664 = vmax.f32 %v651, 0.0
        %v665 = vmax.f32 %v652, 0.0
        %v666 = vmax.f32 %v653, 0.0
        %v667 = vmax.f32 %v654, 0.0
        %v668 = vmax.f32 %v655, 0.0
        %v669 = vmax.f32 %v656, 0.0
        %v670 = vmax.f32 %v657, 0.0
        %v671 = vmax.f32 %v658, 0.0
        %v672 = vmax.f32 %v659, 0.0
        %673 = vst [vmem:[%s299] sm:$0xff] %v660
        %674 = vst [vmem:[%s299 + $0x8] sm:$0xff] %v661
        %675 = vst [vmem:[%s299 + $0x10] sm:$0xff] %v662
        %676 = vst [vmem:[%s299 + $0x18] sm:$0xff] %v663
        %677 = vst [vmem:[%s299 + $0x20] sm:$0xff] %v664
        %678 = vst [vmem:[%s299 + $0x28] sm:$0xff] %v665
        %679 = vst [vmem:[%s299 + $0x30] sm:$0xff] %v666
        %680 = vst [vmem:[%s299 + $0x38] sm:$0xff] %v667
        %681 = vst [vmem:[%s299 + $0x40] sm:$0xff] %v668
        %682 = vst [vmem:[%s299 + $0x48] sm:$0xff] %v669
        %683 = vst [vmem:[%s299 + $0x50] sm:$0xff] %v670
        %684 = vst [vmem:[%s299 + $0x58] sm:$0xff] %v671
        %685 = vst [vmem:[%s299 + $0x60] sm:$0xff] %v672
        %s686 = sand.u32 %s142, 1
        %s687 = scalar_lea.sflag [#allocation4], %s686
        %s688 = sand.u32 %s142, 1
        %s689 = smul.addr %s688, 104
        %s690 = scalar_lea.vmem [#allocation10], %s689
        // Predicated region
        $region57: #{tpu_custom_call.1} parent=39 // pred_check
          %p691 = pneg %p152
        $region58: #{tpu_custom_call.1} parent=39 // pred_check_branch
          %693 = sbr.rel (%p691) target = $region60
        $region59: #{tpu_custom_call.1} parent=39 // pred_region
          %s694 = smul.u32 13, %s24
          %s695 = ssub.s32 25, %s694
          %p696 = scmp.lt.s32.totalorder %s695, 13
          %s697 = scalar_select %p696, %s695, 13
          %s698 = smul.u32 8, %s697
          %s699 = ssub.s32 104, %s698
          %s700 = sshll.u32 %s699, 4
          %701 = vsyncadd %s687, %s700
          %p702 = scmp.ne.s32.totalorder 0, %s698
          %s703 = smul.addr %s694, 8
          %s704 = scalar_lea.hbm %s5, %s703
          %s705 = smul.u32 8, %s697
          %s706 = sshll.u32 %s690, 4
          %s707 = int_to_ptr.vmem [resolvable:$true] %s706
          %s708 = sshll.u32 %s704, 4
          %s709 = int_to_ptr.hbm [resolvable:$true] %s708
          %s710 = sshll.u32 %s705, 4
          %714 = dma.vmem_to_hbm [thread:$0]  (%p702), %s707, %s710, %s709, %s687, 128, 128, 8
        $region60: #{tpu_custom_call.1} parent=39 // pred_fallthru
          _
      $region40: #{tpu_custom_call.1} parent=5 // pred_fallthru
        _
      %p715 = scmp.le.s32.totalorder 2, %s19
      // Predicated region
      $region61: #{tpu_custom_call.1} parent=5 // pred_check
        %p716 = pneg %p715
      $region62: #{tpu_custom_call.1} parent=5 // pred_check_branch
        %718 = sbr.rel (%p716) target = $region64
      $region63: #{tpu_custom_call.1} parent=5 // pred_region
        %s719 = ssub.s32 %s19, 2
        // Predicated region
        $region65: #{tpu_custom_call.1} parent=63 // pred_check
          %p720 = pneg %p158
        $region66: #{tpu_custom_call.1} parent=63 // pred_check_branch
          %722 = sbr.rel (%p720) target = $region68
        $region67: #{tpu_custom_call.1} parent=63 // pred_region
          %s723 = sand.u32 %s143, 1
          %s724 = scalar_lea.sflag [#allocation4], %s723
          %s725 = sand.u32 %s143, 1
          %s726 = smul.addr %s725, 104
          %s727 = scalar_lea.vmem [#allocation10], %s726
          %729 = dma.done %s724, 1664
        $region68: #{tpu_custom_call.1} parent=63 // pred_fallthru
          _
      $region64: #{tpu_custom_call.1} parent=5 // pred_fallthru
        _
    $region6: #{tpu_custom_call.1} parent=1 // loop_footer
      %s23 = sadd.s32 1, %s19
    $region7: #{tpu_custom_call.1} parent=1 // loop_footer_branch
      %18 = sbr.rel target = $region3
    $region8: #{tpu_custom_call.1} parent=1 // loop_exit
      _
    %730 = vsyncpa [#allocation3], 1
    %s731 = scalar_lea.sflag [#allocation3], 1
    %732 = vsyncpa %s731, 1
    %733 = vsyncpa [#allocation6], 1
    %734 = vsyncpa [#allocation9], 1
    %735 = vsyncpa [#allocation4], 1
    %s736 = scalar_lea.sflag [#allocation4], 1
    %737 = vsyncpa %s736, 1

</llo_original>
